<compile_context>
chip_gen: v5e
topology: v5e:2x2
jax: 0.10.0
libtpu: 0.0.40
codegen_flags: <defaults>
</compile_context>

<pallas_src>
import functools

import jax
import jax.numpy as jnp
from jax.experimental import pallas as pl
from jax.experimental.pallas import tpu as pltpu

_LANES = 128
_MAX_TILE_ROWS = 4096            # (4096,128) f32 tile = 2 MiB per input
_VMEM_LIMIT_BYTES = 32 * 1024 * 1024  # explicit scoped-VMEM limit (safe on v5e/v6e/v7x)


def _focal_elementwise(x, t, alpha, gamma, logits, binary_targets):
    """Per-element focal loss in f32; mirrors the PyTorch formula."""
    if logits:
        # numerically-stable binary_cross_entropy_with_logits (reduce=False)
        bce = jnp.maximum(x, 0.0) - x * t + jnp.log1p(jnp.exp(-jnp.abs(x)))
        pt = jnp.exp(-bce)
    else:
        if binary_targets:
            # Opt-in fast path for hard {0,1} labels: pt computed directly,
            # single clamped log -> 1 transcendental/element instead of 3.
            # (Changes semantics for soft labels, hence the explicit flag.)
            pt = jnp.where(t > 0.5, x, 1.0 - x)
            bce = -jnp.maximum(jnp.log(pt), -100.0)
        else:
            # binary_cross_entropy (reduce=False); PyTorch clamps log at -100
            log_p = jnp.maximum(jnp.log(x), -100.0)
            log_1mp = jnp.maximum(jnp.log(1.0 - x), -100.0)
            bce = -(t * log_p + (1.0 - t) * log_1mp)
            pt = jnp.exp(-bce)

    one_m_pt = 1.0 - pt

    g = float(gamma)
    if g == round(g) and 0.0 <= g <= 8.0:
        gi = int(round(g))
        if gi == 0:
            w = jnp.ones_like(one_m_pt)
        else:
            w = one_m_pt
            for _ in range(gi - 1):
                w = w * one_m_pt
    else:
        w = one_m_pt ** g
    return alpha * w * bce


# --------------------------------------------------------------------------
# reduce=True kernel: per-lane accumulation into a tiny resident (1,128)
# output block per split; rows reduced in-kernel.
# --------------------------------------------------------------------------
def _focal_sum_kernel(o_ref, t_ref, part_ref, *, alpha, gamma, logits,
                      binary_targets, n_valid, tile_rows, steps_per_split,
                      total_steps, needs_mask, has_overhang):
    c = pl.program_id(0)          # split ("parallel") axis
    i = pl.program_id(1)          # reduction ("arbitrary") axis
    step = c * steps_per_split + i
    last_block = total_steps - 1

    @pl.when(i == 0)
    def _():
        part_ref[...] = jnp.zeros_like(part_ref)

    x = o_ref[...].astype(jnp.float32)
    t = t_ref[...].astype(jnp.float32)
    f = _focal_elementwise(x, t, alpha, gamma, logits, binary_targets)

    def _acc(vals):
        part_ref[...] += jnp.sum(vals, axis=0, keepdims=True)

    if needs_mask:
        # Only the final valid block contains padding / OOB garbage; mask it
        # there and accumulate unmasked everywhere else (hot path).
        @pl.when(step == last_block)
        def _():
            full_rows = n_valid // _LANES       # complete 128-lane rows
            rem = n_valid % _LANES              # valid lanes in last row
            # Row-granular comparison: avoids int32 overflow of a full linear
            # index (valid for n_valid < 2^38).
            row_ids = (jax.lax.broadcasted_iota(jnp.int32, f.shape, 0)
                       + last_block * tile_rows)
            valid = row_ids < full_rows
            if rem:
                lane_ids = jax.lax.broadcasted_iota(jnp.int32, f.shape, 1)
                valid = valid | ((row_ids == full_rows) & (lane_ids < rem))
            _acc(jnp.where(valid, f, 0.0))

        not_last = step != last_block
        if has_overhang:
            not_last = jnp.logical_and(not_last, step < total_steps)

        @pl.when(not_last)
        def _():
            _acc(f)
    else:
        if has_overhang:
            @pl.when(step < total_steps)
            def _():
                _acc(f)
        else:
            _acc(f)


# --------------------------------------------------------------------------
# reduce=False kernel: plain elementwise map.
# --------------------------------------------------------------------------
def _focal_map_kernel(o_ref, t_ref, out_ref, *, alpha, gamma, logits,
                      binary_targets):
    x = o_ref[...].astype(jnp.float32)
    t = t_ref[...].astype(jnp.float32)
    out_ref[...] = _focal_elementwise(
        x, t, alpha, gamma, logits, binary_targets).astype(out_ref.dtype)


def _as_lane_rows(arr):
    """Reshape to a lane-dense (rows, 128) slab. Zero-copy when size % 128 == 0."""
    flat = arr.reshape(-1)
    pad = (-flat.size) % _LANES
    if pad:
        # Tiny fallback copy only for sizes not a multiple of 128 lanes.
        flat = jnp.pad(flat, (0, pad))
    return flat.reshape(-1, _LANES)


def _transcendentals_per_elem(logits, binary_targets):
    if logits:
        return 3
    return 1 if binary_targets else 3


def focal_loss(outputs, targets, *, alpha=1.0, gamma=2.0, logits=False,
               reduce=True, binary_targets=False,
               max_tile_rows=_MAX_TILE_ROWS):
    """Mirrors FocalLoss(alpha, gamma, logits, reduce).forward(outputs, targets)."""
    assert outputs.shape == targets.shape
    n_elems = int(outputs.size)
    orig_shape = outputs.shape

    o2 = _as_lane_rows(outputs)   # native dtype; cast happens in-kernel
    t2 = _as_lane_rows(targets)
    rows = o2.shape[0]

    if rows <= max_tile_rows:
        tile_rows = rows                       # full block (equals array dim)
    else:
        tile_rows = max(8, (max_tile_rows // 8) * 8)   # keep (8,128)-aligned
    total_steps = (rows + tile_rows - 1) // tile_rows

    trans = _transcendentals_per_elem(logits, binary_targets)
    in_bytes = int(o2.size * o2.dtype.itemsize + t2.size * t2.dtype.itemsize)

    if not reduce:
        cost = pl.CostEstimate(
            flops=12 * n_elems,
            transcendentals=trans * n_elems,
            bytes_accessed=in_bytes + int(o2.size * outputs.dtype.itemsize))
        # TODO(synk): sweep pipeline_mode=pl.Buffered(3) on the input specs if
        # profiles show exposed DMA at large tile sizes.
        out_flat = pl.pallas_call(
            functools.partial(_focal_map_kernel, alpha=float(alpha),
                              gamma=float(gamma), logits=bool(logits),
                              binary_targets=bool(binary_targets)),
            out_shape=jax.ShapeDtypeStruct((rows, _LANES), outputs.dtype),
            grid_spec=pltpu.PrefetchScalarGridSpec(
                num_scalar_prefetch=0,
                grid=(total_steps,),
                in_specs=[pl.BlockSpec((tile_rows, _LANES), lambda i: (i, 0)),
                          pl.BlockSpec((tile_rows, _LANES), lambda i: (i, 0))],
                out_specs=pl.BlockSpec((tile_rows, _LANES), lambda i: (i, 0))),
            compiler_params=pltpu.CompilerParams(
                dimension_semantics=("parallel",),
                vmem_limit_bytes=_VMEM_LIMIT_BYTES),
            cost_estimate=cost,
        )(o2, t2)
        return out_flat.reshape(-1)[:n_elems].reshape(orig_shape)

    # ---------------- reduce=True ----------------
    # Unconditional 2-way split of the reduction whenever there are >= 2
    # steps; an odd step count leaves one overhanging (empty) step on the
    # second split, which is clamped in the index_map and skipped in-kernel.
    # On v7x megacore the leading "parallel" axis shards the splits across the
    # two TensorCores (switch to pltpu.CORE_PARALLEL if profiling shows it
    # stays on one core); on v5e/v6e it just runs serially at ~no cost.
    n_splits = 2 if total_steps >= 2 else 1
    steps_per_split = -(-total_steps // n_splits)
    has_overhang = n_splits * steps_per_split > total_steps
    needs_mask = (rows * _LANES != n_elems) or (total_steps * tile_rows != rows)
    last_block = total_steps - 1

    def in_index_map(c, i):
        step = c * steps_per_split + i
        if has_overhang:
            step = jnp.minimum(step, last_block)   # never DMA past the array
        return (step, 0)

    kernel = functools.partial(
        _focal_sum_kernel, alpha=float(alpha), gamma=float(gamma),
        logits=bool(logits), binary_targets=bool(binary_targets),
        n_valid=n_elems, tile_rows=int(tile_rows),
        steps_per_split=int(steps_per_split), total_steps=int(total_steps),
        needs_mask=bool(needs_mask), has_overhang=bool(has_overhang))

    cost = pl.CostEstimate(
        flops=12 * n_elems,
        transcendentals=trans * n_elems,
        bytes_accessed=in_bytes + n_splits * _LANES * 4)

    # TODO(synk): sweep pipeline_mode=pl.Buffered(3) on the input specs if
    # profiles show exposed DMA at large tile sizes.
    in_spec = pl.BlockSpec((tile_rows, _LANES), in_index_map)

    partials = pl.pallas_call(
        kernel,
        out_shape=jax.ShapeDtypeStruct((n_splits, 1, _LANES), jnp.float32),
        grid_spec=pltpu.PrefetchScalarGridSpec(
            num_scalar_prefetch=0,
            grid=(n_splits, steps_per_split),
            in_specs=[in_spec, in_spec],
            # leading dim squeezed (None == pl.Squeezed()): kernel sees (1,128)
            out_specs=pl.BlockSpec((None, 1, _LANES), lambda c, i: (c, 0, 0))),
        compiler_params=pltpu.CompilerParams(
            dimension_semantics=("parallel", "arbitrary"),
            vmem_limit_bytes=_VMEM_LIMIT_BYTES),
        cost_estimate=cost,
    )(o2, t2)

    # Tiny epilogue: sum of n_splits * 128 partial lane sums, then mean scale.
    return (jnp.sum(partials) / n_elems).astype(outputs.dtype)


# --------------------------------------------------------------------------
# Pure-JAX reference (independent formula, pow form), for correctness checks.
# --------------------------------------------------------------------------
def _ref_focal_map(outputs, targets, alpha=1.0, gamma=2.0, logits=False):
    x = outputs.astype(jnp.float32)
    t = targets.astype(jnp.float32)
    if logits:
        bce = jnp.maximum(x, 0.0) - x * t + jnp.log1p(jnp.exp(-jnp.abs(x)))
    else:
        bce = -(t * jnp.maximum(jnp.log(x), -100.0)
                + (1.0 - t) * jnp.maximum(jnp.log(1.0 - x), -100.0))
    pt = jnp.exp(-bce)
    return alpha * (1.0 - pt) ** gamma * bce


def _ref_focal_loss(outputs, targets, alpha=1.0, gamma=2.0, logits=False):
    return jnp.mean(_ref_focal_map(outputs, targets, alpha, gamma, logits))


if __name__ == "__main__":
    key = jax.random.PRNGKey(0)
    k1, k2, k3, k4 = jax.random.split(key, 4)

    # NCHW inputs, as a typical segmentation head would emit.
    shape = (2, 4, 16, 16)
    x_prob = jax.random.uniform(k1, shape, jnp.float32,
                                minval=0.02, maxval=0.98)   # probabilities
    x_logit = jax.random.normal(k3, shape, jnp.float32)      # raw logits
    t = (jax.random.uniform(k2, shape, jnp.float32) > 0.5).astype(jnp.float32)

    # 1) probabilities, mean reduction (default module config)
    loss = jax.block_until_ready(
        focal_loss(x_prob, t, alpha=1.0, gamma=2.0, logits=False, reduce=True))
    ref = _ref_focal_loss(x_prob, t, alpha=1.0, gamma=2.0, logits=False)
    assert jnp.allclose(loss, ref, rtol=1e-5, atol=1e-6), (loss, ref)

    # 2) logits variant, mean reduction
    loss_l = jax.block_until_ready(
        focal_loss(x_logit, t, alpha=0.25, gamma=2.0, logits=True, reduce=True))
    ref_l = _ref_focal_loss(x_logit, t, alpha=0.25, gamma=2.0, logits=True)
    assert jnp.allclose(loss_l, ref_l, rtol=1e-5, atol=1e-6), (loss_l, ref_l)

    # 3) elementwise map (reduce=False)
    fmap = jax.block_until_ready(
        focal_loss(x_prob, t, alpha=1.0, gamma=2.0, logits=False, reduce=False))
    ref_map = _ref_focal_map(x_prob, t, alpha=1.0, gamma=2.0, logits=False)
    assert fmap.shape == x_prob.shape
    assert jnp.allclose(fmap, ref_map, rtol=1e-5, atol=1e-6)

    # 4) force the multi-step / 2-split / odd-overhang / partial-block path
    #    on a small tensor by shrinking the tile size.
    shape2 = (2, 4, 16, 17)      # 2176 elems -> 17 lane rows, 3 steps of 8
    xp2 = jax.random.uniform(k4, shape2, jnp.float32, minval=0.02, maxval=0.98)
    tg2 = (jax.random.uniform(k2, shape2, jnp.float32) > 0.5).astype(jnp.float32)
    loss2 = jax.block_until_ready(focal_loss(xp2, tg2, max_tile_rows=8))
    ref2 = _ref_focal_loss(xp2, tg2)
    assert jnp.allclose(loss2, ref2, rtol=1e-5, atol=1e-6), (loss2, ref2)

    # 5) ragged element count (lane padding in the last row)
    shape3 = (3, 5, 7, 11)       # 1155 elems -> 9 full rows + 3 lanes
    xp3 = jax.random.uniform(k1, shape3, jnp.float32, minval=0.02, maxval=0.98)
    tg3 = (jax.random.uniform(k3, shape3, jnp.float32) > 0.5).astype(jnp.float32)
    loss3 = jax.block_until_ready(focal_loss(xp3, tg3))
    ref3 = _ref_focal_loss(xp3, tg3)
    assert jnp.allclose(loss3, ref3, rtol=1e-5, atol=1e-6), (loss3, ref3)

    # 6) opt-in binary_targets fast path matches the reference for hard labels
    loss_b = jax.block_until_ready(focal_loss(x_prob, t, binary_targets=True))
    assert jnp.allclose(loss_b, ref, rtol=1e-5, atol=1e-6), (loss_b, ref)

    print("KERNEL_OK")
</pallas_src>

<mosaic_0001>
module attributes {stable_mosaic.version = 11 : i64} {
  func.func @_focal_sum_kernel(%arg0: i32, %arg1: i32, %arg2: memref<16x128xf32, #tpu.memory_space<vmem>>, %arg3: memref<16x128xf32, #tpu.memory_space<vmem>>, %arg4: memref<1x1x128xf32, #tpu.memory_space<vmem>>) attributes {dimension_semantics = [#tpu.dimension_semantics<parallel>, #tpu.dimension_semantics<arbitrary>], iteration_bounds = array<i64: 1, 1>, scalar_prefetch = 0 : i64, scratch_operands = 0 : i64, tpu.core_type = #tpu.core_type<tc>, window_params = [{transform_indices = @transform_0, window_bounds = array<i64: 16, 128>}, {transform_indices = @transform_1, window_bounds = array<i64: 16, 128>}, {transform_indices = @transform_2, window_bounds = array<i64: 1, 1, 128>}]} {
    %c0_i32 = arith.constant 0 : i32
    %0 = arith.cmpi eq, %arg1, %c0_i32 : i32
    %1 = arith.extui %0 : i1 to i32
    %c0_i32_0 = arith.constant 0 : i32
    %2 = arith.cmpi ne, %1, %c0_i32_0 : i32
    scf.if %2 {
      %cst_18 = arith.constant 0.000000e+00 : f32
      %37 = vector.broadcast %cst_18 : f32 to vector<1x128xf32>
      %c0_19 = arith.constant 0 : index
      %c0_20 = arith.constant 0 : index
      %c0_21 = arith.constant 0 : index
      %38 = vector.load %arg4[%c0_19, %c0_20, %c0_21] : memref<1x1x128xf32, #tpu.memory_space<vmem>>, vector<1x1x128xf32>
      %39 = vector.shape_cast %38 : vector<1x1x128xf32> to vector<1x128xf32>
      %40 = vector.shape_cast %37 : vector<1x128xf32> to vector<1x1x128xf32>
      tpu.vector_store %arg4[%c0_19, %c0_20, %c0_21], %40 {strides = array<i32>} : memref<1x1x128xf32, #tpu.memory_space<vmem>>, vector<1x1x128xf32>,
    } else {
    }
    %c0 = arith.constant 0 : index
    %c0_1 = arith.constant 0 : index
    %3 = vector.load %arg2[%c0, %c0_1] : memref<16x128xf32, #tpu.memory_space<vmem>>, vector<16x128xf32>
    %c0_2 = arith.constant 0 : index
    %c0_3 = arith.constant 0 : index
    %4 = vector.load %arg3[%c0_2, %c0_3] : memref<16x128xf32, #tpu.memory_space<vmem>>, vector<16x128xf32>
    %5 = math.log %3 : vector<16x128xf32>
    %cst = arith.constant -1.000000e+02 : f32
    %6 = vector.broadcast %cst : f32 to vector<16x128xf32>
    %7 = arith.maximumf %5, %6 : vector<16x128xf32>
    %cst_4 = arith.constant 1.000000e+00 : f32
    %8 = vector.broadcast %cst_4 : f32 to vector<16x128xf32>
    %9 = arith.subf %8, %3 : vector<16x128xf32>
    %10 = math.log %9 : vector<16x128xf32>
    %cst_5 = arith.constant -1.000000e+02 : f32
    %11 = vector.broadcast %cst_5 : f32 to vector<16x128xf32>
    %12 = arith.maximumf %10, %11 : vector<16x128xf32>
    %13 = arith.mulf %4, %7 : vector<16x128xf32>
    %cst_6 = arith.constant 1.000000e+00 : f32
    %14 = vector.broadcast %cst_6 : f32 to vector<16x128xf32>
    %15 = arith.subf %14, %4 : vector<16x128xf32>
    %16 = arith.mulf %15, %12 : vector<16x128xf32>
    %17 = arith.addf %13, %16 : vector<16x128xf32>
    %cst_7 = arith.constant 0.000000e+00 : f32
    %18 = vector.broadcast %cst_7 : f32 to vector<16x128xf32>
    %19 = arith.subf %18, %17 : vector<16x128xf32>
    %cst_8 = arith.constant 0.000000e+00 : f32
    %20 = vector.broadcast %cst_8 : f32 to vector<16x128xf32>
    %21 = arith.subf %20, %19 : vector<16x128xf32>
    %22 = math.exp %21 : vector<16x128xf32>
    %cst_9 = arith.constant 1.000000e+00 : f32
    %23 = vector.broadcast %cst_9 : f32 to vector<16x128xf32>
    %24 = arith.subf %23, %22 : vector<16x128xf32>
    %25 = arith.mulf %24, %24 : vector<16x128xf32>
    %cst_10 = arith.constant 1.000000e+00 : f32
    %26 = vector.broadcast %cst_10 : f32 to vector<16x128xf32>
    %27 = arith.mulf %26, %25 : vector<16x128xf32>
    %28 = arith.mulf %27, %19 : vector<16x128xf32>
    %c0_11 = arith.constant 0 : index
    %c0_12 = arith.constant 0 : index
    %c0_13 = arith.constant 0 : index
    %29 = vector.load %arg4[%c0_11, %c0_12, %c0_13] : memref<1x1x128xf32, #tpu.memory_space<vmem>>, vector<1x1x128xf32>
    %30 = vector.shape_cast %29 : vector<1x1x128xf32> to vector<1x128xf32>
    %cst_14 = arith.constant dense<0.000000e+00> : vector<128xf32>
    %31 = vector.multi_reduction <add>, %28, %cst_14 [0] : vector<16x128xf32> to vector<128xf32>
    %32 = vector.shape_cast %31 : vector<128xf32> to vector<1x128xf32>
    %33 = arith.addf %30, %32 : vector<1x128xf32>
    %c0_15 = arith.constant 0 : index
    %c0_16 = arith.constant 0 : index
    %c0_17 = arith.constant 0 : index
    %34 = vector.load %arg4[%c0_15, %c0_16, %c0_17] : memref<1x1x128xf32, #tpu.memory_space<vmem>>, vector<1x1x128xf32>
    %35 = vector.shape_cast %34 : vector<1x1x128xf32> to vector<1x128xf32>
    %36 = vector.shape_cast %33 : vector<1x128xf32> to vector<1x1x128xf32>
    tpu.vector_store %arg4[%c0_15, %c0_16, %c0_17], %36 {strides = array<i32>} : memref<1x1x128xf32, #tpu.memory_space<vmem>>, vector<1x1x128xf32>,
    return
  }
  func.func @transform_0(%arg0: i32, %arg1: i32) -> (i32, i32) {
    %c1_i32 = arith.constant 1 : i32
    %0 = arith.muli %arg0, %c1_i32 : i32
    %1 = arith.addi %0, %arg1 : i32
    %c0_i32 = arith.constant 0 : i32
    %c0_i32_0 = arith.constant 0 : i32
    return %1, %c0_i32 : i32, i32
  }
  func.func @transform_1(%arg0: i32, %arg1: i32) -> (i32, i32) {
    %c1_i32 = arith.constant 1 : i32
    %0 = arith.muli %arg0, %c1_i32 : i32
    %1 = arith.addi %0, %arg1 : i32
    %c0_i32 = arith.constant 0 : i32
    %c0_i32_0 = arith.constant 0 : i32
    return %1, %c0_i32 : i32, i32
  }
  func.func @transform_2(%arg0: i32, %arg1: i32) -> (i32, i32, i32) {
    %c0_i32 = arith.constant 0 : i32
    %c0_i32_0 = arith.constant 0 : i32
    %c0_i32_1 = arith.constant 0 : i32
    return %arg0, %c0_i32, %c0_i32_0 : i32, i32, i32
  }
}

</mosaic_0001>

<llo_original>
// kernel: tpu_custom_call.1
$region0: #{tpu_custom_call.1}
  #allocation0 [shape = 'u32[]', space=smem, size = 0x4, offset = 0x4, fixed_abs, tag = 'smem constant byte address 0x4 - core index']
  #allocation1 [shape = 'u32[72,128]{1,0:T(1,128)}', space=vmem, size = 0x9000, scoped, tag = 'internal scratch']
  %s0 = inlined_call_operand.hbm [shape: f32[16,128], index: 0, kind: input, shape index: {}]
  %s1 = inlined_call_operand.hbm [shape: f32[16,128], index: 1, kind: input, shape index: {}]
  %s2 = inlined_call_operand.hbm [shape: f32[1,1,128], index: 2, kind: output, shape index: {}]
  %s3 = sld [smem:[#allocation0]]
  $region30: #{tpu_custom_call.1} parent=0
    _
  %s5 = ssub.s32 1, %s3
  %s6 = scalar_select 0, %s5, %s3
  $region1: #{tpu_custom_call.1} parent=0
    #allocation2 [shape = 'u8[8192]{0}', space=vmem, size = 0x2000, scoped, tag = 'input window, operand 0, single buffered']
    #allocation3 [shape = 's32[1]{0}', space=sflag, size = 0x4, scoped, tag = 'scoped memory for tpu_custom_call.1']
    #allocation4 [shape = 's32[1]{0}', space=sflag, size = 0x4, scoped, tag = 'scoped memory for tpu_custom_call.1']
    #allocation5 [shape = 'u8[8192]{0}', space=vmem, size = 0x2000, scoped, tag = 'input window, operand 1, single buffered']
    #allocation6 [shape = 's32[1]{0}', space=sflag, size = 0x4, scoped, tag = 'scoped memory for tpu_custom_call.1']
    #allocation7 [shape = 'u8[512]{0}', space=vmem, size = 0x400, scoped, tag = 'output window, operand 0, single buffered']
    %7 = vsyncpa [#allocation3], 0
    %8 = vsyncpa [#allocation6], 0
    %9 = vsyncpa [#allocation4], 0
    // Predicated region
    $region2: #{tpu_custom_call.1} parent=1 // pred_check
      _
    $region3: #{tpu_custom_call.1} parent=1 // pred_check_branch
      %11 = sbr.rel (0) target = $region5
    $region4: #{tpu_custom_call.1} parent=1 // pred_region
      %s12 = sadd.s32 0, 0
      %s13 = smul.u32 2, %s12
      %15 = vsyncadd [#allocation3], 0
      %s16 = smul.addr %s13, 8
      %s17 = scalar_lea.hbm %s0, %s16
      %s18 = sshll.u32 %s17, 4
      %s19 = int_to_ptr.hbm [resolvable:$true] %s18
      %s20 = sshll.u32 [#allocation2], 4
      %s21 = int_to_ptr.vmem [resolvable:$true] %s20
      %26 = dma.hbm_to_vmem [thread:$0]  %s19, 256, %s21, [#allocation3], 128, 128, 8
    $region5: #{tpu_custom_call.1} parent=1 // pred_fallthru
      _
    // Predicated region
    $region6: #{tpu_custom_call.1} parent=1 // pred_check
      _
    $region7: #{tpu_custom_call.1} parent=1 // pred_check_branch
      %28 = sbr.rel (0) target = $region9
    $region8: #{tpu_custom_call.1} parent=1 // pred_region
      %s29 = sadd.s32 0, 0
      %s30 = smul.u32 2, %s29
      %32 = vsyncadd [#allocation6], 0
      %s33 = smul.addr %s30, 8
      %s34 = scalar_lea.hbm %s1, %s33
      %s35 = sshll.u32 %s34, 4
      %s36 = int_to_ptr.hbm [resolvable:$true] %s35
      %s37 = sshll.u32 [#allocation5], 4
      %s38 = int_to_ptr.vmem [resolvable:$true] %s37
      %43 = dma.hbm_to_vmem [thread:$0]  %s36, 256, %s38, [#allocation6], 128, 128, 8
    $region9: #{tpu_custom_call.1} parent=1 // pred_fallthru
      _
    // Predicated region
    $region10: #{tpu_custom_call.1} parent=1 // pred_check
      _
    $region11: #{tpu_custom_call.1} parent=1 // pred_check_branch
      %45 = sbr.rel (0) target = $region13
    $region12: #{tpu_custom_call.1} parent=1 // pred_region
      %47 = dma.done [#allocation3], 256
    $region13: #{tpu_custom_call.1} parent=1 // pred_fallthru
      _
    // Predicated region
    $region14: #{tpu_custom_call.1} parent=1 // pred_check
      _
    $region15: #{tpu_custom_call.1} parent=1 // pred_check_branch
      %49 = sbr.rel (0) target = $region17
    $region16: #{tpu_custom_call.1} parent=1 // pred_region
      %51 = dma.done [#allocation6], 256
    $region17: #{tpu_custom_call.1} parent=1 // pred_fallthru
      _
    %s52 = sadd.s32 0, 0
    %s53 = smul.u32 2, %s52
    %s54 = sadd.s32 0, 0
    %s55 = smul.u32 2, %s54
    %p56 = scmp.eq.s32.totalorder 0, 0
    // Predicated region
    $region18: #{tpu_custom_call.1} parent=1 // pred_check
      %p57 = pneg %p56
    $region19: #{tpu_custom_call.1} parent=1 // pred_check_branch
      %59 = sbr.rel (%p57) target = $region21
    $region20: #{tpu_custom_call.1} parent=1 // pred_region
      %60 = vst [vmem:[#allocation7] sm:$0x1] 0.0
    $region21: #{tpu_custom_call.1} parent=1 // pred_fallthru
      _
    %v61 = vld [vmem:[#allocation2] sm:$0xff]
    %v62 = vld [vmem:[#allocation2 + $0x8] sm:$0xff]
    %v63 = vld [vmem:[#allocation5] sm:$0xff]
    %v64 = vld [vmem:[#allocation5 + $0x8] sm:$0xff]
    %v65 = vlog2.pop %v61
    %v66 = vmul.f32 %v65, 0.6931472
    %v67 = vlog2.pop %v62
    %v68 = vmul.f32 %v67, 0.6931472
    %v69 = vmax.f32 %v66, -100.0
    %v70 = vmax.f32 %v68, -100.0
    %v71 = vsub.f32 1.0, %v61
    %v72 = vsub.f32 1.0, %v62
    %v73 = vlog2.pop %v71
    %v74 = vmul.f32 %v73, 0.6931472
    %v75 = vlog2.pop %v72
    %v76 = vmul.f32 %v75, 0.6931472
    %v77 = vmax.f32 %v74, -100.0
    %v78 = vmax.f32 %v76, -100.0
    %v79 = vmul.f32 %v63, %v69
    %v80 = vmul.f32 %v64, %v70
    %v81 = vsub.f32 1.0, %v63
    %v82 = vsub.f32 1.0, %v64
    %v83 = vmul.f32 %v81, %v77
    %v84 = vmul.f32 %v82, %v78
    %v85 = vadd.f32 %v79, %v83
    %v86 = vadd.f32 %v80, %v84
    %v87 = vsub.f32 0.0, %v85
    %v88 = vsub.f32 0.0, %v86
    %v89 = vsub.f32 0.0, %v87
    %v90 = vsub.f32 0.0, %v88
    %v91 = vmul.f32 %v89, 1.442695
    %v92 = vpow.pop %v91
    %v93 = vmul.f32 %v90, 1.442695
    %v94 = vpow.pop %v93
    %v95 = vsub.f32 1.0, %v92
    %v96 = vsub.f32 1.0, %v94
    %v97 = vmul.f32 %v95, %v95
    %v98 = vmul.f32 %v96, %v96
    %v99 = vmul.f32 %v97, %v87
    %v100 = vmul.f32 %v98, %v88
    %v101 = vld [vmem:[#allocation7] sm:$0x1]
    %v102 = vadd.f32 %v99, %v100
    %v103 = vrot.slane %v102, 4
    %v104 = vadd.f32 %v102, %v103
    %v105 = vrot.slane %v104, 2
    %v106 = vadd.f32 %v104, %v105
    %v107 = vrot.slane %v106, 1
    %v108 = vadd.f32 %v106, %v107
    %v109 = vadd.f32 %v101, %v108
    %110 = vst [vmem:[#allocation7] sm:$0x1] %v109
    // Predicated region
    $region22: #{tpu_custom_call.1} parent=1 // pred_check
      _
    $region23: #{tpu_custom_call.1} parent=1 // pred_check_branch
      %112 = sbr.rel (0) target = $region25
    $region24: #{tpu_custom_call.1} parent=1 // pred_region
      %114 = vsyncadd [#allocation4], 0
      %s116 = sshll.u32 [#allocation7], 4
      %s117 = int_to_ptr.vmem [resolvable:$true] %s116
      %s118 = sshll.u32 %s2, 4
      %s119 = int_to_ptr.hbm [resolvable:$true] %s118
      %121 = dma.vmem_to_hbm [thread:$0]  %s117, 16, %s119, [#allocation4]
    $region25: #{tpu_custom_call.1} parent=1 // pred_fallthru
      _
    // Predicated region
    $region26: #{tpu_custom_call.1} parent=1 // pred_check
      _
    $region27: #{tpu_custom_call.1} parent=1 // pred_check_branch
      %123 = sbr.rel (0) target = $region29
    $region28: #{tpu_custom_call.1} parent=1 // pred_region
      %125 = dma.done [#allocation4], 16
    $region29: #{tpu_custom_call.1} parent=1 // pred_fallthru
      _
    %126 = vsyncpa [#allocation3], 1
    %127 = vsyncpa [#allocation6], 1
    %128 = vsyncpa [#allocation4], 1

</llo_original>
